<compile_context>
chip_gen: v5e
topology: v5e:2x2
jax: 0.10.0
libtpu: 0.0.40
codegen_flags: <defaults>
</compile_context>

<pallas_src>
import jax
import jax.numpy as jnp
from jax.experimental import pallas as pl
from jax.experimental.pallas import tpu as pltpu


def bart_blender(hidden_states, blend_factor, weights_t, *, seq_tile=None,
                 compute_dtype=jnp.bfloat16, out_dtype=None):
    """hidden_states: [E, B, S, D] (no pre-cast needed); blend_factor: [B, E];
    weights_t: [E, D_in, D_out] (selected experts' W.T, ascending expert id).
    compute_dtype=jnp.float32 gives exact parity with the f32 torch module."""
    E, B, S, D = hidden_states.shape
    assert blend_factor.shape == (B, E)
    assert weights_t.shape == (E, D, D)
    out_dtype = jnp.dtype(hidden_states.dtype if out_dtype is None else out_dtype)
    compute_dtype = jnp.dtype(compute_dtype)

    # One-time parameter-side prep (normally done at weight-load time): compute-dtype
    # weights, flattened so the kernel contracts over K = E*D in a single matmul.
    w = weights_t.astype(compute_dtype).reshape(E * D, D)
    blend = blend_factor.astype(jnp.float32)

    xb = jnp.dtype(hidden_states.dtype).itemsize
    cb = compute_dtype.itemsize
    ob = out_dtype.itemsize

    # Per-generation VMEM budget (v7x: 64 MiB physical per TC -> 48 MiB cap;
    # v5e/v6e: 128 MiB -> 112 MiB cap), leaving headroom for compiler scratch.
    try:
        vmem_phys = int(pltpu.get_tpu_info().vmem_capacity_bytes)
    except Exception:
        vmem_phys = 128 << 20
    vmem_cap = vmem_phys - (16 << 20)

    def vmem_estimate(ts):
        return (2 * E * D * D * cb        # resident weights (default pipeline double-buffers)
                + 2 * E * ts * D * xb     # activation blocks (double-buffered, original dtype)
                + 2 * ts * D * ob         # output blocks (double-buffered)
                + E * ts * D * 4          # f32 scaled-tile temporaries
                + E * ts * D * cb         # fused (ts, E*D) LHS
                + 2 * ts * D * 4)         # f32 matmul result + slack

    # TODO(synk): single-buffer the constant weight block (pipeline_mode=pl.Buffered(1))
    # when very large E*D*D needs it; until then the estimate keeps the honest 2x.

    if seq_tile is None:
        cands = [t for t in (512, 256, 128)
                 if S % t == 0 and vmem_estimate(t) <= vmem_cap]
        ts = S
        if cands:
            ts = cands[0]
            if B % 2 == 1:  # v7x has 2 TCs: prefer an even total grid-step count
                for t in cands:
                    if (S // t) % 2 == 0:
                        ts = t
                        break
    else:
        ts = seq_tile
    assert S % ts == 0, f"seq_tile {ts} must divide S={S}"
    s_tiles = S // ts

    est = vmem_estimate(ts)
    if est > vmem_cap:
        raise ValueError(
            f"BartBlender tiling needs ~{est >> 20} MiB VMEM but the cap is "
            f"{vmem_cap >> 20} MiB; reduce seq_tile, E, or D.")
    vmem_limit = int(min(max(est + (4 << 20), 16 << 20), vmem_cap))

    fused = (D % 128 == 0) or (E == 1)

    def blender_kernel(blend_ref, x_ref, w_ref, o_ref):
        # blend_ref : SMEM (B, E) f32      (whole array, scalar-indexed)
        # x_ref     : VMEM (E, 1, ts, D)   original dtype (cast happens here, not in HBM)
        # w_ref     : VMEM (E*D, D)        compute dtype, resident (constant block index)
        # o_ref     : VMEM (1, ts, D)      out dtype
        b = pl.program_id(0)
        # Blend-scale each expert tile in f32 (v5e-friendly), then cast for the MXU.
        tiles = [(x_ref[e, 0].astype(jnp.float32) * blend_ref[b, e]).astype(compute_dtype)
                 for e in range(E)]
        if fused:
            # Single K = E*D contraction: the MXU accumulates across experts internally.
            lhs = tiles[0] if E == 1 else jnp.concatenate(tiles, axis=-1)
            acc = jnp.dot(lhs, w_ref[...], preferred_element_type=jnp.float32)
        else:
            # Lane-unaligned D: per-expert dots with f32 accumulation.
            acc = None
            for e in range(E):
                y = jnp.dot(tiles[e], w_ref[pl.ds(e * D, D), :],
                            preferred_element_type=jnp.float32)
                acc = y if acc is None else acc + y
        o_ref[0] = acc.astype(o_ref.dtype)

    return pl.pallas_call(
        blender_kernel,
        out_shape=jax.ShapeDtypeStruct((B, S, D), out_dtype),
        grid_spec=pltpu.PrefetchScalarGridSpec(
            num_scalar_prefetch=0,
            grid=(B, s_tiles),
            in_specs=[
                # whole blend-factor matrix in SMEM (tiny), scalar-indexed
                pl.BlockSpec(memory_space=pltpu.MemorySpace.SMEM),
                # all selected experts' activations for this (b, seq tile), original dtype
                pl.BlockSpec((E, 1, ts, D), lambda b, si: (0, b, si, 0)),
                # constant block index -> flattened weights stay resident in VMEM
                pl.BlockSpec((E * D, D), lambda b, si: (0, 0)),
            ],
            out_specs=pl.BlockSpec((1, ts, D), lambda b, si: (b, si, 0)),
        ),
        compiler_params=pltpu.CompilerParams(
            dimension_semantics=("parallel", "parallel"),
            vmem_limit_bytes=vmem_limit),
    )(blend, hidden_states, w)


if __name__ == "__main__":
    key = jax.random.PRNGKey(0)

    # Small config consistent with the module; d_model lane-aligned (128) so the fused
    # K=E*D matmul path is the one exercised.
    num_expert = 4
    d_model = 128
    batch = 2
    seq = 8
    expert_output_ids = [0, 2, 3]
    e_sel = len(expert_output_ids)

    k_w, k_h, k_b = jax.random.split(key, 3)

    # nn.Linear-style weights: (out_features, in_features) per expert.
    all_weights = jax.random.normal(
        k_w, (num_expert, d_model, d_model), dtype=jnp.float32) * 0.05
    hidden_states = jax.random.normal(
        k_h, (e_sel, batch, seq, d_model), dtype=jnp.float32)
    blend_factor = jax.nn.softmax(
        jax.random.normal(k_b, (batch, e_sel), dtype=jnp.float32), axis=-1)

    # Static expert selection (ascending id, as in the torch loop) + pre-transpose:
    # W_sel_t[e] = W[sorted(expert_output_ids)[e]].T  -> (D_in, D_out)
    sel = jnp.asarray(sorted(expert_output_ids), dtype=jnp.int32)
    weights_t = jnp.transpose(all_weights[sel], (0, 2, 1))

    out = jax.block_until_ready(bart_blender(hidden_states, blend_factor, weights_t))

    # (a) Exact torch-semantics f32 reference (loose tol: kernel computes in bf16 on MXU).
    per_expert = jnp.einsum('ebsd,edo->ebso', hidden_states, weights_t)
    ref_f32 = jnp.einsum('be,ebsd->bsd', blend_factor, per_expert)
    # (b) Reference mimicking the kernel's rounding points (blend-scale in f32, round to
    #     bf16, exact products + f32 accumulation) -> tight tolerance catches real bugs.
    bf16r = lambda v: v.astype(jnp.bfloat16).astype(jnp.float32)
    x_scaled = bf16r(hidden_states * blend_factor.T[:, :, None, None])
    ref_bf16 = jnp.einsum('ebsd,edo->bso', x_scaled, bf16r(weights_t))

    assert out.shape == (batch, seq, d_model)
    assert out.dtype == hidden_states.dtype
    assert jnp.allclose(out, ref_bf16, atol=2e-3, rtol=2e-3)
    assert jnp.allclose(out, ref_f32, atol=3e-2, rtol=3e-2)
    print("KERNEL_OK")
</pallas_src>

<mosaic_0001>
module attributes {stable_mosaic.version = 11 : i64} {
  func.func @blender_kernel(%arg0: i32, %arg1: i32, %arg2: memref<2x3xf32, #tpu.memory_space<smem>>, %arg3: memref<3x1x8x128xf32, #tpu.memory_space<vmem>>, %arg4: memref<384x128xbf16, #tpu.memory_space<vmem>>, %arg5: memref<1x8x128xf32, #tpu.memory_space<vmem>>) attributes {dimension_semantics = [#tpu.dimension_semantics<parallel>, #tpu.dimension_semantics<parallel>], iteration_bounds = array<i64: 2, 1>, scalar_prefetch = 0 : i64, scratch_operands = 0 : i64, tpu.core_type = #tpu.core_type<tc>, window_params = [{transform_indices = @transform_0, window_bounds = array<i64: 2, 3>}, {transform_indices = @transform_1, window_bounds = array<i64: 3, 1, 8, 128>}, {pipeline_mode = #tpu.pipeline_mode<synchronous>, transform_indices = @transform_2, window_bounds = array<i64: 384, 128>}, {transform_indices = @transform_3, window_bounds = array<i64: 1, 8, 128>}]} {
    %c0 = arith.constant 0 : index
    %c0_0 = arith.constant 0 : index
    %c0_1 = arith.constant 0 : index
    %c0_2 = arith.constant 0 : index
    %0 = vector.load %arg3[%c0, %c0_0, %c0_1, %c0_2] : memref<3x1x8x128xf32, #tpu.memory_space<vmem>>, vector<1x1x8x128xf32>
    %1 = vector.shape_cast %0 : vector<1x1x8x128xf32> to vector<8x128xf32>
    %2 = arith.index_cast %arg0 : i32 to index
    %c0_3 = arith.constant 0 : index
    %3 = memref.load %arg2[%2, %c0_3] : memref<2x3xf32, #tpu.memory_space<smem>>
    %4 = vector.broadcast %3 : f32 to vector<8x128xf32>
    %5 = arith.mulf %1, %4 : vector<8x128xf32>
    %6 = arith.truncf %5 : vector<8x128xf32> to vector<8x128xbf16>
    %c1 = arith.constant 1 : index
    %c0_4 = arith.constant 0 : index
    %c0_5 = arith.constant 0 : index
    %c0_6 = arith.constant 0 : index
    %7 = vector.load %arg3[%c1, %c0_4, %c0_5, %c0_6] : memref<3x1x8x128xf32, #tpu.memory_space<vmem>>, vector<1x1x8x128xf32>
    %8 = vector.shape_cast %7 : vector<1x1x8x128xf32> to vector<8x128xf32>
    %9 = arith.index_cast %arg0 : i32 to index
    %c1_7 = arith.constant 1 : index
    %10 = memref.load %arg2[%9, %c1_7] : memref<2x3xf32, #tpu.memory_space<smem>>
    %11 = vector.broadcast %10 : f32 to vector<8x128xf32>
    %12 = arith.mulf %8, %11 : vector<8x128xf32>
    %13 = arith.truncf %12 : vector<8x128xf32> to vector<8x128xbf16>
    %c2 = arith.constant 2 : index
    %c0_8 = arith.constant 0 : index
    %c0_9 = arith.constant 0 : index
    %c0_10 = arith.constant 0 : index
    %14 = vector.load %arg3[%c2, %c0_8, %c0_9, %c0_10] : memref<3x1x8x128xf32, #tpu.memory_space<vmem>>, vector<1x1x8x128xf32>
    %15 = vector.shape_cast %14 : vector<1x1x8x128xf32> to vector<8x128xf32>
    %16 = arith.index_cast %arg0 : i32 to index
    %c2_11 = arith.constant 2 : index
    %17 = memref.load %arg2[%16, %c2_11] : memref<2x3xf32, #tpu.memory_space<smem>>
    %18 = vector.broadcast %17 : f32 to vector<8x128xf32>
    %19 = arith.mulf %15, %18 : vector<8x128xf32>
    %20 = arith.truncf %19 : vector<8x128xf32> to vector<8x128xbf16>
    %21 = tpu.concatenate %6, %13, %20 in 1 : vector<8x128xbf16>, vector<8x128xbf16>, vector<8x128xbf16> -> vector<8x384xbf16>
    %c0_12 = arith.constant 0 : index
    %c0_13 = arith.constant 0 : index
    %22 = vector.load %arg4[%c0_12, %c0_13] : memref<384x128xbf16, #tpu.memory_space<vmem>>, vector<384x128xbf16>
    %cst = arith.constant dense<0.000000e+00> : vector<8x128xf32>
    %23 = tpu.matmul %21, %22, %cst {dimension_numbers = #tpu.dot_dimension_numbers<[1], [0], [0], [1], [0, 0, 1, 1], [], []>} : vector<8x384xbf16>, vector<384x128xbf16>, vector<8x128xf32> -> vector<8x128xf32>
    %c0_14 = arith.constant 0 : index
    %c0_15 = arith.constant 0 : index
    %c0_16 = arith.constant 0 : index
    %24 = vector.load %arg5[%c0_14, %c0_15, %c0_16] : memref<1x8x128xf32, #tpu.memory_space<vmem>>, vector<1x8x128xf32>
    %25 = vector.shape_cast %24 : vector<1x8x128xf32> to vector<8x128xf32>
    %26 = vector.shape_cast %23 : vector<8x128xf32> to vector<1x8x128xf32>
    tpu.vector_store %arg5[%c0_14, %c0_15, %c0_16], %26 {strides = array<i32>} : memref<1x8x128xf32, #tpu.memory_space<vmem>>, vector<1x8x128xf32>,
    return
  }
  func.func @transform_0(%arg0: i32, %arg1: i32) -> (i32, i32) {
    %c0_i32 = arith.constant 0 : i32
    %c0_i32_0 = arith.constant 0 : i32
    %c0_i32_1 = arith.constant 0 : i32
    return %c0_i32, %c0_i32_0 : i32, i32
  }
  func.func @transform_1(%arg0: i32, %arg1: i32) -> (i32, i32, i32, i32) {
    %c0_i32 = arith.constant 0 : i32
    %c0_i32_0 = arith.constant 0 : i32
    %c0_i32_1 = arith.constant 0 : i32
    return %c0_i32, %arg0, %arg1, %c0_i32_0 : i32, i32, i32, i32
  }
  func.func @transform_2(%arg0: i32, %arg1: i32) -> (i32, i32) {
    %c0_i32 = arith.constant 0 : i32
    %c0_i32_0 = arith.constant 0 : i32
    %c0_i32_1 = arith.constant 0 : i32
    return %c0_i32, %c0_i32_0 : i32, i32
  }
  func.func @transform_3(%arg0: i32, %arg1: i32) -> (i32, i32, i32) {
    %c0_i32 = arith.constant 0 : i32
    %c0_i32_0 = arith.constant 0 : i32
    return %arg0, %arg1, %c0_i32 : i32, i32, i32
  }
}

</mosaic_0001>

<llo_original>
// kernel: tpu_custom_call.1
$region0: #{tpu_custom_call.1}
  #allocation0 [shape = 'u32[]', space=smem, size = 0x4, offset = 0x4, fixed_abs, tag = 'smem constant byte address 0x4 - core index']
  #allocation1 [shape = 'u32[72,128]{1,0:T(1,128)}', space=vmem, size = 0x9000, scoped, tag = 'internal scratch']
  %s0 = inlined_call_operand.hbm [shape: f32[2,3], index: 0, kind: input, shape index: {}]
  %s1 = inlined_call_operand.hbm [shape: f32[3,2,8,128], index: 1, kind: input, shape index: {}]
  %s2 = inlined_call_operand.hbm [shape: bf16[384,128], index: 2, kind: input, shape index: {}]
  %s3 = inlined_call_operand.hbm [shape: f32[2,8,128], index: 3, kind: output, shape index: {}]
  %s4 = sld [smem:[#allocation0]]
  $region57: #{tpu_custom_call.1} parent=0
    _
  %s6 = ssub.s32 1, %s4
  %s7 = scalar_select 0, %s6, %s4
  $region1: #{tpu_custom_call.1} parent=0
    #allocation2 [shape = 'u8[1024]{0}', space=smem, size = 0x400, scoped, tag = 'input window, operand 0, single buffered']
    #allocation3 [shape = 's32[2]{0}', space=sflag, size = 0x8, scoped, tag = 'scoped memory for tpu_custom_call.1']
    #allocation4 [shape = 's32[2]{0}', space=sflag, size = 0x8, scoped, tag = 'scoped memory for tpu_custom_call.1']
    #allocation5 [shape = 's32[2]{0}', space=sflag, size = 0x8, scoped, tag = 'scoped memory for tpu_custom_call.1']
    #allocation6 [shape = 'u8[24576]{0}', space=vmem, size = 0x6000, scoped, tag = 'input window, operand 1']
    #allocation7 [shape = 'u8[98304]{0}', space=vmem, size = 0x18000, scoped, tag = 'input window, operand 2, single buffered']
    #allocation8 [shape = 's32[1]{0}', space=sflag, size = 0x4, scoped, tag = 'scoped memory for tpu_custom_call.1']
    #allocation9 [shape = 'u8[8192]{0}', space=vmem, size = 0x2000, scoped, tag = 'output window, operand 0']
    %8 = vsyncpa [#allocation5], 0
    %9 = vsyncpa [#allocation3], 0
    %s10 = scalar_lea.sflag [#allocation3], 1
    %11 = vsyncpa %s10, 0
    %12 = vsyncpa [#allocation8], 0
    %13 = vsyncpa [#allocation4], 0
    %s14 = scalar_lea.sflag [#allocation4], 1
    %15 = vsyncpa %s14, 0
    loop: start=0, step=1, limit=4
    $region2: #{tpu_custom_call.1} parent=1 // loop_pre_header
      _
    $region3: #{tpu_custom_call.1} parent=1 // loop_header
      %s17 = sphi 0, %s21
      %p18 = scmp.ge.s32.totalorder %s17, 4
      %s24 = sphi 0, %s36
      %s25 = sphi 0, %s32
      %s26 = sphi 0, %s24
      %s27 = sphi 0, %s25
      %s28 = sphi 0, %s26
      %s29 = sphi 0, %s27
      %s37 = sphi 0, %s37
      %s39 = sphi 0, %s37
      %s40 = sphi 0, %s39
      %s54 = sphi 0, %s40
      %s62 = sphi 0, %s64
      %s65 = sphi 0, %s62
      %s66 = sphi 0, %s65
      %s82 = sphi 0, %s66
      %s86 = sphi 0, %s86
      %s88 = sphi 0, %s86
      %s89 = sphi 0, %s88
      %s103 = sphi 0, %s89
      %s111 = sphi 0, %s113
      %s114 = sphi 0, %s111
      %s115 = sphi 0, %s114
      %s131 = sphi 0, %s115
    $region4: #{tpu_custom_call.1} parent=1 // loop_header_branch
      %20 = sbr.rel (%p18) target = $region8
    $region5: #{tpu_custom_call.1} parent=1 // loop_body
      %s22 = ssub.s32 %s17, 1
      %s23 = ssub.s32 %s17, 2
      %s30 = sadd.s32 1, %s25
      %p31 = scmp.ge.s32.totalorder %s30, 1
      %s32 = scalar_select %p31, 0, %s30
      %s33 = sadd.s32 1, %s24
      %s34 = scalar_select %p31, %s33, %s24
      %p35 = scmp.ge.s32.totalorder %s34, 2
      %s36 = scalar_select %p35, 0, %s34
      %s38 = sadd.s32 %s37, 1
      %p41 = scmp.eq.s32.totalorder %s17, 1
      %p42 = scmp.ne.s32.totalorder %s37, %s39
      %p43 = scmp.eq.s32.totalorder %s17, 0
      %p44 = por %p42, %p43
      %p45 = scmp.ne.s32.totalorder %s37, %s39
      %p46 = scmp.eq.s32.totalorder %s22, 1
      %p47 = por %p45, %p46
      %p48 = scmp.ne.s32.totalorder %s39, %s40
      %p49 = scmp.eq.s32.totalorder %s22, 0
      %p50 = por %p48, %p49
      %p51 = scmp.ne.s32.totalorder %s39, %s40
      %p52 = scmp.eq.s32.totalorder %s23, 1
      %p53 = por %p51, %p52
      %p55 = scmp.ne.s32.totalorder %s40, %s54
      %p56 = scmp.eq.s32.totalorder %s23, 0
      %p57 = por %p55, %p56
      %s58 = ssub.s32 %s24, %s36
      %s59 = ssub.s32 %s25, %s32
      %s60 = sor.u32 %s58, %s59
      %p61 = scmp.eq.s32.totalorder %s60, 0
      %s63 = sadd.s32 %s62, 1
      %s64 = scalar_select %p61, %s62, %s63
      %p67 = pneg %p61
      %p68 = scmp.eq.s32.totalorder %s17, 1
      %p69 = por %p67, %p68
      %p70 = scmp.ne.s32.totalorder %s62, %s65
      %p71 = scmp.eq.s32.totalorder %s17, 0
      %p72 = por %p70, %p71
      %p73 = scmp.ne.s32.totalorder %s62, %s65
      %p74 = scmp.eq.s32.totalorder %s22, 1
      %p75 = por %p73, %p74
      %p76 = scmp.ne.s32.totalorder %s65, %s66
      %p77 = scmp.eq.s32.totalorder %s22, 0
      %p78 = por %p76, %p77
      %p79 = scmp.ne.s32.totalorder %s65, %s66
      %p80 = scmp.eq.s32.totalorder %s23, 1
      %p81 = por %p79, %p80
      %p83 = scmp.ne.s32.totalorder %s66, %s82
      %p84 = scmp.eq.s32.totalorder %s23, 0
      %p85 = por %p83, %p84
      %s87 = sadd.s32 %s86, 1
      %p90 = scmp.eq.s32.totalorder %s17, 1
      %p91 = scmp.ne.s32.totalorder %s86, %s88
      %p92 = scmp.eq.s32.totalorder %s17, 0
      %p93 = por %p91, %p92
      %p94 = scmp.ne.s32.totalorder %s86, %s88
      %p95 = scmp.eq.s32.totalorder %s22, 1
      %p96 = por %p94, %p95
      %p97 = scmp.ne.s32.totalorder %s88, %s89
      %p98 = scmp.eq.s32.totalorder %s22, 0
      %p99 = por %p97, %p98
      %p100 = scmp.ne.s32.totalorder %s88, %s89
      %p101 = scmp.eq.s32.totalorder %s23, 1
      %p102 = por %p100, %p101
      %p104 = scmp.ne.s32.totalorder %s89, %s103
      %p105 = scmp.eq.s32.totalorder %s23, 0
      %p106 = por %p104, %p105
      %s107 = ssub.s32 %s24, %s36
      %s108 = ssub.s32 %s25, %s32
      %s109 = sor.u32 %s107, %s108
      %p110 = scmp.eq.s32.totalorder %s109, 0
      %s112 = sadd.s32 %s111, 1
      %s113 = scalar_select %p110, %s111, %s112
      %p116 = pneg %p110
      %p117 = scmp.eq.s32.totalorder %s17, 1
      %p118 = por %p116, %p117
      %p119 = scmp.ne.s32.totalorder %s111, %s114
      %p120 = scmp.eq.s32.totalorder %s17, 0
      %p121 = por %p119, %p120
      %p122 = scmp.ne.s32.totalorder %s111, %s114
      %p123 = scmp.eq.s32.totalorder %s22, 1
      %p124 = por %p122, %p123
      %p125 = scmp.ne.s32.totalorder %s114, %s115
      %p126 = scmp.eq.s32.totalorder %s22, 0
      %p127 = por %p125, %p126
      %p128 = scmp.ne.s32.totalorder %s114, %s115
      %p129 = scmp.eq.s32.totalorder %s23, 1
      %p130 = por %p128, %p129
      %p132 = scmp.ne.s32.totalorder %s115, %s131
      %p133 = scmp.eq.s32.totalorder %s23, 0
      %p134 = por %p132, %p133
      %p135 = scmp.le.s32.totalorder 1, %s17
      %p136 = scmp.lt.s32.totalorder %s17, 3
      %p137 = pnand %p135, %p136
      %p138 = pneg %p137
      // Predicated region
      $region9: #{tpu_custom_call.1} parent=5 // pred_check
        _
      $region10: #{tpu_custom_call.1} parent=5 // pred_check_branch
        %140 = sbr.rel (%p137) target = $region12
      $region11: #{tpu_custom_call.1} parent=5 // pred_region
        %s141 = ssub.s32 %s17, 1
        // Predicated region
        $region13: #{tpu_custom_call.1} parent=11 // pred_check
          %p142 = pneg %p50
        $region14: #{tpu_custom_call.1} parent=11 // pred_check_branch
          %144 = sbr.rel (%p142) target = $region16
        $region15: #{tpu_custom_call.1} parent=11 // pred_region
          %146 = vsyncadd [#allocation5], 0
          %s148 = sshll.u32 %s0, 4
          %s149 = int_to_ptr.hbm [resolvable:$true] %s148
          %151 = dma.hbm_to_smem %s149, 32, [#allocation2], [#allocation5]
        $region16: #{tpu_custom_call.1} parent=11 // pred_fallthru
          _
        // Predicated region
        $region17: #{tpu_custom_call.1} parent=11 // pred_check
          %p152 = pneg %p99
        $region18: #{tpu_custom_call.1} parent=11 // pred_check_branch
          %154 = sbr.rel (%p152) target = $region20
        $region19: #{tpu_custom_call.1} parent=11 // pred_region
          %156 = vsyncadd [#allocation8], 0
          %s157 = sshll.u32 %s2, 4
          %s158 = int_to_ptr.hbm [resolvable:$true] %s157
          %s159 = sshll.u32 [#allocation7], 4
          %s160 = int_to_ptr.vmem [resolvable:$true] %s159
          %165 = dma.hbm_to_vmem [thread:$0]  %s158, 3072, %s160, [#allocation8], 64, 64, 4
        $region20: #{tpu_custom_call.1} parent=11 // pred_fallthru
          _
      $region12: #{tpu_custom_call.1} parent=5 // pred_fallthru
        _
      %p166 = scmp.lt.s32.totalorder %s17, 2
      // Predicated region
      $region21: #{tpu_custom_call.1} parent=5 // pred_check
        %p167 = pneg %p166
      $region22: #{tpu_custom_call.1} parent=5 // pred_check_branch
        %169 = sbr.rel (%p167) target = $region24
      $region23: #{tpu_custom_call.1} parent=5 // pred_region
        // Predicated region
        $region25: #{tpu_custom_call.1} parent=23 // pred_check
          %p170 = pneg %p72
        $region26: #{tpu_custom_call.1} parent=23 // pred_check_branch
          %172 = sbr.rel (%p170) target = $region28
        $region27: #{tpu_custom_call.1} parent=23 // pred_region
          %s173 = sand.u32 %s62, 1
          %s174 = scalar_lea.sflag [#allocation3], %s173
          %s175 = sand.u32 %s62, 1
          %s176 = smul.addr %s175, 24
          %s177 = scalar_lea.vmem [#allocation6], %s176
          %179 = vsyncadd %s174, 0
          %s180 = sadd.s32 %s25, %s24
          %s181 = smul.addr %s180, 8
          %s182 = scalar_lea.hbm %s1, %s181
          %s183 = sshll.u32 %s182, 4
          %s184 = int_to_ptr.hbm [resolvable:$true] %s183
          %s185 = sshll.u32 %s177, 4
          %s186 = int_to_ptr.vmem [resolvable:$true] %s185
          %191 = dma.hbm_to_vmem [thread:$0]  %s184, 384, %s186, %s174, 256, 128, 8
        $region28: #{tpu_custom_call.1} parent=23 // pred_fallthru
          _
      $region24: #{tpu_custom_call.1} parent=5 // pred_fallthru
        _
      %p192 = scmp.le.s32.totalorder 1, %s17
      %p193 = scmp.lt.s32.totalorder %s17, 3
      %p194 = pnand %p192, %p193
      %p195 = pneg %p194
      // Predicated region
      $region29: #{tpu_custom_call.1} parent=5 // pred_check
        _
      $region30: #{tpu_custom_call.1} parent=5 // pred_check_branch
        %197 = sbr.rel (%p194) target = $region32
      $region31: #{tpu_custom_call.1} parent=5 // pred_region
        %s198 = ssub.s32 %s17, 1
        // Predicated region
        $region33: #{tpu_custom_call.1} parent=31 // pred_check
          %p199 = pneg %p50
        $region34: #{tpu_custom_call.1} parent=31 // pred_check_branch
          %201 = sbr.rel (%p199) target = $region36
        $region35: #{tpu_custom_call.1} parent=31 // pred_region
          %203 = dma.done [#allocation5], 32
        $region36: #{tpu_custom_call.1} parent=31 // pred_fallthru
          _
        %s204 = sand.u32 %s65, 1
        %s205 = scalar_lea.sflag [#allocation3], %s204
        %s206 = sand.u32 %s65, 1
        %s207 = smul.addr %s206, 24
        %s208 = scalar_lea.vmem [#allocation6], %s207
        // Predicated region
        $region37: #{tpu_custom_call.1} parent=31 // pred_check
          %p209 = pneg %p78
        $region38: #{tpu_custom_call.1} parent=31 // pred_check_branch
          %211 = sbr.rel (%p209) target = $region40
        $region39: #{tpu_custom_call.1} parent=31 // pred_region
          %213 = dma.done %s205, 384
        $region40: #{tpu_custom_call.1} parent=31 // pred_fallthru
          _
        // Predicated region
        $region41: #{tpu_custom_call.1} parent=31 // pred_check
          %p214 = pneg %p99
        $region42: #{tpu_custom_call.1} parent=31 // pred_check_branch
          %216 = sbr.rel (%p214) target = $region44
        $region43: #{tpu_custom_call.1} parent=31 // pred_region
          %218 = dma.done [#allocation8], 3072
        $region44: #{tpu_custom_call.1} parent=31 // pred_fallthru
          _
        %219 = sfence
        %p220 = pneg %p50
        %p221 = pneg %p47
        %s222 = sand.u32 %s65, 1
        %s223 = scalar_lea.sflag [#allocation3], %s222
        %s224 = sand.u32 %s65, 1
        %s225 = smul.addr %s224, 24
        %s226 = scalar_lea.vmem [#allocation6], %s225
        %p227 = pneg %p78
        %p228 = pneg %p75
        %p229 = pneg %p99
        %p230 = pneg %p96
        %p231 = pneg %p127
        %p232 = pneg %p124
        %s233 = sand.u32 %s114, 1
        %s234 = scalar_lea.sflag [#allocation4], %s233
        %s235 = sand.u32 %s114, 1
        %s236 = smul.addr %s235, 8
        %s237 = scalar_lea.vmem [#allocation9], %s236
        %v238 = vld [vmem:[%s208] sm:$0xff]
        %s239 = smul.u32 %s26, 128
        %s240 = sld [smem:[#allocation2 + %s239]]
        %v241 = vstv %s240
        %v242 = vmul.f32 %v238, %v241
        %v243 = vpack.c.bf16 %v242, %v242
        %s244 = scalar_lea.vmem %s208, 8 [#allocation6]
        %v245 = vld [vmem:[%s244] sm:$0xff]
        %s246 = sadd.s32 %s239, 1
        %s247 = sld [smem:[#allocation2 + %s246]]
        %v248 = vstv %s247
        %v249 = vmul.f32 %v245, %v248
        %v250 = vpack.c.bf16 %v249, %v249
        %s251 = scalar_lea.vmem %s208, 16 [#allocation6]
        %v252 = vld [vmem:[%s251] sm:$0xff]
        %s253 = sadd.s32 %s239, 2
        %s254 = sld [smem:[#allocation2 + %s253]]
        %v255 = vstv %s254
        %v256 = vmul.f32 %v252, %v255
        %v257 = vpack.c.bf16 %v256, %v256
        %v258 = vld [vmem:[#allocation7] sm:$0xf]
        %v259 = vld [vmem:[#allocation7 + $0x4] sm:$0xf]
        %v260 = vld [vmem:[#allocation7 + $0x8] sm:$0xf]
        %v261 = vld [vmem:[#allocation7 + $0xc] sm:$0xf]
        %v262 = vld [vmem:[#allocation7 + $0x10] sm:$0xf]
        %v263 = vld [vmem:[#allocation7 + $0x14] sm:$0xf]
        %v264 = vld [vmem:[#allocation7 + $0x18] sm:$0xf]
        %v265 = vld [vmem:[#allocation7 + $0x1c] sm:$0xf]
        %v266 = vld [vmem:[#allocation7 + $0x20] sm:$0xf]
        %v267 = vld [vmem:[#allocation7 + $0x24] sm:$0xf]
        %v268 = vld [vmem:[#allocation7 + $0x28] sm:$0xf]
        %v269 = vld [vmem:[#allocation7 + $0x2c] sm:$0xf]
        %v270 = vld [vmem:[#allocation7 + $0x30] sm:$0xf]
        %v271 = vld [vmem:[#allocation7 + $0x34] sm:$0xf]
        %v272 = vld [vmem:[#allocation7 + $0x38] sm:$0xf]
        %v273 = vld [vmem:[#allocation7 + $0x3c] sm:$0xf]
        %v274 = vld [vmem:[#allocation7 + $0x40] sm:$0xf]
        %v275 = vld [vmem:[#allocation7 + $0x44] sm:$0xf]
        %v276 = vld [vmem:[#allocation7 + $0x48] sm:$0xf]
        %v277 = vld [vmem:[#allocation7 + $0x4c] sm:$0xf]
        %v278 = vld [vmem:[#allocation7 + $0x50] sm:$0xf]
        %v279 = vld [vmem:[#allocation7 + $0x54] sm:$0xf]
        %v280 = vld [vmem:[#allocation7 + $0x58] sm:$0xf]
        %v281 = vld [vmem:[#allocation7 + $0x5c] sm:$0xf]
        %v282 = vld [vmem:[#allocation7 + $0x60] sm:$0xf]
        %v283 = vld [vmem:[#allocation7 + $0x64] sm:$0xf]
        %v284 = vld [vmem:[#allocation7 + $0x68] sm:$0xf]
        %v285 = vld [vmem:[#allocation7 + $0x6c] sm:$0xf]
        %v286 = vld [vmem:[#allocation7 + $0x70] sm:$0xf]
        %v287 = vld [vmem:[#allocation7 + $0x74] sm:$0xf]
        %v288 = vld [vmem:[#allocation7 + $0x78] sm:$0xf]
        %v289 = vld [vmem:[#allocation7 + $0x7c] sm:$0xf]
        %v290 = vld [vmem:[#allocation7 + $0x80] sm:$0xf]
        %v291 = vld [vmem:[#allocation7 + $0x84] sm:$0xf]
        %v292 = vld [vmem:[#allocation7 + $0x88] sm:$0xf]
        %v293 = vld [vmem:[#allocation7 + $0x8c] sm:$0xf]
        %v294 = vld [vmem:[#allocation7 + $0x90] sm:$0xf]
        %v295 = vld [vmem:[#allocation7 + $0x94] sm:$0xf]
        %v296 = vld [vmem:[#allocation7 + $0x98] sm:$0xf]
        %v297 = vld [vmem:[#allocation7 + $0x9c] sm:$0xf]
        %v298 = vld [vmem:[#allocation7 + $0xa0] sm:$0xf]
        %v299 = vld [vmem:[#allocation7 + $0xa4] sm:$0xf]
        %v300 = vld [vmem:[#allocation7 + $0xa8] sm:$0xf]
        %v301 = vld [vmem:[#allocation7 + $0xac] sm:$0xf]
        %v302 = vld [vmem:[#allocation7 + $0xb0] sm:$0xf]
        %v303 = vld [vmem:[#allocation7 + $0xb4] sm:$0xf]
        %v304 = vld [vmem:[#allocation7 + $0xb8] sm:$0xf]
        %v305 = vld [vmem:[#allocation7 + $0xbc] sm:$0xf]
        %v354 = vunpack.c.l.b16 %v258
        %v355 = vunpack.c.l.b16 %v259
        %v356 = vunpack.c.l.b16 %v260
        %v357 = vunpack.c.l.b16 %v261
        %v358 = vunpack.c.l.b16 %v262
        %v359 = vunpack.c.l.b16 %v263
        %v360 = vunpack.c.l.b16 %v264
        %v361 = vunpack.c.l.b16 %v265
        %v362 = vunpack.c.l.b16 %v266
        %v363 = vunpack.c.l.b16 %v267
        %v364 = vunpack.c.l.b16 %v268
        %v365 = vunpack.c.l.b16 %v269
        %v366 = vunpack.c.l.b16 %v270
        %v367 = vunpack.c.l.b16 %v271
        %v368 = vunpack.c.l.b16 %v272
        %v369 = vunpack.c.l.b16 %v273
        %v370 = vunpack.c.l.b16 %v274
        %v371 = vunpack.c.l.b16 %v275
        %v372 = vunpack.c.l.b16 %v276
        %v373 = vunpack.c.l.b16 %v277
        %v374 = vunpack.c.l.b16 %v278
        %v375 = vunpack.c.l.b16 %v279
        %v376 = vunpack.c.l.b16 %v280
        %v377 = vunpack.c.l.b16 %v281
        %v378 = vunpack.c.l.b16 %v282
        %v379 = vunpack.c.l.b16 %v283
        %v380 = vunpack.c.l.b16 %v284
        %v381 = vunpack.c.l.b16 %v285
        %v382 = vunpack.c.l.b16 %v286
        %v383 = vunpack.c.l.b16 %v287
        %v384 = vunpack.c.l.b16 %v288
        %v385 = vunpack.c.l.b16 %v289
        %v386 = vunpack.c.l.b16 %v290
        %v387 = vunpack.c.l.b16 %v291
        %v388 = vunpack.c.l.b16 %v292
        %v389 = vunpack.c.l.b16 %v293
        %v390 = vunpack.c.l.b16 %v294
        %v391 = vunpack.c.l.b16 %v295
        %v392 = vunpack.c.l.b16 %v296
        %v393 = vunpack.c.l.b16 %v297
        %v394 = vunpack.c.l.b16 %v298
        %v395 = vunpack.c.l.b16 %v299
        %v396 = vunpack.c.l.b16 %v300
        %v397 = vunpack.c.l.b16 %v301
        %v398 = vunpack.c.l.b16 %v302
        %v399 = vunpack.c.l.b16 %v303
        %v400 = vunpack.c.l.b16 %v304
        %v401 = vunpack.c.l.b16 %v305
        %v402 = vpack.c.b16 %v355, %v354
        %v403 = vpack.c.b16 %v357, %v356
        %v404 = vpack.c.b16 %v359, %v358
        %v405 = vpack.c.b16 %v361, %v360
        %v406 = vpack.c.b16 %v363, %v362
        %v407 = vpack.c.b16 %v365, %v364
        %v408 = vpack.c.b16 %v367, %v366
        %v409 = vpack.c.b16 %v369, %v368
        %v410 = vpack.c.b16 %v371, %v370
        %v411 = vpack.c.b16 %v373, %v372
        %v412 = vpack.c.b16 %v375, %v374
        %v413 = vpack.c.b16 %v377, %v376
        %v414 = vpack.c.b16 %v379, %v378
        %v415 = vpack.c.b16 %v381, %v380
        %v416 = vpack.c.b16 %v383, %v382
        %v417 = vpack.c.b16 %v385, %v384
        %v418 = vpack.c.b16 %v387, %v386
        %v419 = vpack.c.b16 %v389, %v388
        %v420 = vpack.c.b16 %v391, %v390
        %v421 = vpack.c.b16 %v393, %v392
        %v422 = vpack.c.b16 %v395, %v394
        %v423 = vpack.c.b16 %v397, %v396
        %v424 = vpack.c.b16 %v399, %v398
        %v425 = vpack.c.b16 %v401, %v400
        %450 = vmatpush.bf16.msra.mxu0 %v409
        %451 = vmatpush.bf16.msra.mxu0 %v408
        %452 = vmatpush.bf16.msra.mxu0 %v407
        %453 = vmatpush.bf16.msra.mxu0 %v406
        %454 = vmatpush.bf16.msra.mxu0 %v405
        %455 = vmatpush.bf16.msra.mxu0 %v404
        %456 = vmatpush.bf16.msra.mxu0 %v403
        %457 = vmatpush.bf16.msra.mxu0 %v402
        %458 = vmatmul.bf16.gmra.mxu0 %v243
        %v459 = vpop.f32.mrf.mxu0
        %v460 = vadd.f32 0.0, %v459
        %v461 = vpop.f32.mrf.mxu0
        %462 = vdwg.mxu0
        %463 = vmatpush.bf16.msra.mxu0 %v417
        %464 = vmatpush.bf16.msra.mxu0 %v416
        %465 = vmatpush.bf16.msra.mxu0 %v415
        %466 = vmatpush.bf16.msra.mxu0 %v414
        %467 = vmatpush.bf16.msra.mxu0 %v413
        %468 = vmatpush.bf16.msra.mxu0 %v412
        %469 = vmatpush.bf16.msra.mxu0 %v411
        %470 = vmatpush.bf16.msra.mxu0 %v410
        %471 = vmatmul.bf16.gmra.mxu0 %v250
        %v472 = vpop.f32.mrf.mxu0
        %v473 = vadd.f32 %v460, %v472
        %v474 = vpop.f32.mrf.mxu0
        %475 = vdwg.mxu0
        %476 = vmatpush.bf16.msra.mxu0 %v425
        %477 = vmatpush.bf16.msra.mxu0 %v424
        %478 = vmatpush.bf16.msra.mxu0 %v423
        %479 = vmatpush.bf16.msra.mxu0 %v422
        %480 = vmatpush.bf16.msra.mxu0 %v421
        %481 = vmatpush.bf16.msra.mxu0 %v420
        %482 = vmatpush.bf16.msra.mxu0 %v419
        %483 = vmatpush.bf16.msra.mxu0 %v418
        %484 = vmatmul.bf16.gmra.mxu0 %v257
        %v485 = vpop.f32.mrf.mxu0
        %v486 = vadd.f32 %v473, %v485
        %v487 = vpop.f32.mrf.mxu0
        %488 = vdwg.mxu0
        %489 = vst [vmem:[%s237] sm:$0xff] %v486
        %s490 = sand.u32 %s114, 1
        %s491 = scalar_lea.sflag [#allocation4], %s490
        %s492 = sand.u32 %s114, 1
        %s493 = smul.addr %s492, 8
        %s494 = scalar_lea.vmem [#allocation9], %s493
        // Predicated region
        $region45: #{tpu_custom_call.1} parent=31 // pred_check
          %p495 = pneg %p124
        $region46: #{tpu_custom_call.1} parent=31 // pred_check_branch
          %497 = sbr.rel (%p495) target = $region48
        $region47: #{tpu_custom_call.1} parent=31 // pred_region
          %499 = vsyncadd %s491, 0
          %s500 = sadd.s32 %s27, %s26
          %s501 = smul.addr %s500, 8
          %s502 = scalar_lea.hbm %s3, %s501
          %s504 = sshll.u32 %s494, 4
          %s505 = int_to_ptr.vmem [resolvable:$true] %s504
          %s506 = sshll.u32 %s502, 4
          %s507 = int_to_ptr.hbm [resolvable:$true] %s506
          %509 = dma.vmem_to_hbm [thread:$0]  %s505, 128, %s507, %s491
        $region48: #{tpu_custom_call.1} parent=31 // pred_fallthru
          _
      $region32: #{tpu_custom_call.1} parent=5 // pred_fallthru
        _
      %p510 = scmp.le.s32.totalorder 2, %s17
      // Predicated region
      $region49: #{tpu_custom_call.1} parent=5 // pred_check
        %p511 = pneg %p510
      $region50: #{tpu_custom_call.1} parent=5 // pred_check_branch
        %513 = sbr.rel (%p511) target = $region52
      $region51: #{tpu_custom_call.1} parent=5 // pred_region
        %s514 = ssub.s32 %s17, 2
        // Predicated region
        $region53: #{tpu_custom_call.1} parent=51 // pred_check
          %p515 = pneg %p130
        $region54: #{tpu_custom_call.1} parent=51 // pred_check_branch
          %517 = sbr.rel (%p515) target = $region56
        $region55: #{tpu_custom_call.1} parent=51 // pred_region
          %s518 = sand.u32 %s115, 1
          %s519 = scalar_lea.sflag [#allocation4], %s518
          %s520 = sand.u32 %s115, 1
          %s521 = smul.addr %s520, 8
          %s522 = scalar_lea.vmem [#allocation9], %s521
          %524 = dma.done %s519, 128
        $region56: #{tpu_custom_call.1} parent=51 // pred_fallthru
          _
      $region52: #{tpu_custom_call.1} parent=5 // pred_fallthru
        _
    $region6: #{tpu_custom_call.1} parent=1 // loop_footer
      %s21 = sadd.s32 1, %s17
    $region7: #{tpu_custom_call.1} parent=1 // loop_footer_branch
      %16 = sbr.rel target = $region3
    $region8: #{tpu_custom_call.1} parent=1 // loop_exit
      _
    %525 = vsyncpa [#allocation3], 1
    %s526 = scalar_lea.sflag [#allocation3], 1
    %527 = vsyncpa %s526, 1
    %528 = vsyncpa [#allocation8], 1
    %529 = vsyncpa [#allocation4], 1
    %s530 = scalar_lea.sflag [#allocation4], 1
    %531 = vsyncpa %s530, 1
    %532 = vsyncpa [#allocation5], 1
    %s533 = scalar_lea.sflag [#allocation5], 1
    %534 = vsyncpa %s533, 1

</llo_original>
